<compile_context>
chip_gen: v7x
topology: tpu7x:2x2x1
jax: 0.10.0
libtpu: 0.0.40
codegen_flags: <defaults>
</compile_context>

<pallas_src>
import math

import jax
import jax.numpy as jnp
from jax import lax
from jax.experimental import pallas as pl
from jax.experimental.pallas import tpu as pltpu

LANE = 128


def _round_up(x, m):
    return (x + m - 1) // m * m


def _lcm(a, b):
    return a * b // math.gcd(a, b)


def _vmem_limit(nbytes):
    # Explicit limit with headroom, capped below v7x's 64 MiB physical VMEM so
    # the compiler keeps room for internal scratch / spills.
    return int(min(48 << 20, max(16 << 20, 2 * int(nbytes))))


# --------------------- fused 3-layer kernel (small graphs) --------------------
def cgnn_fused_kernel(a_ref, x_ref,
                      w1_ref, b1_ref,
                      w2_ref, b2_ref,
                      w3_ref, b3_ref,
                      out_ref):
    a = a_ref[...]                            # (N, N) bf16 normalized adjacency
    h = x_ref[...].astype(jnp.bfloat16)       # (N, Cin)

    def layer(h_bf16, w_ref, b_ref, out_dtype):
        # X@W first (keeps the NxN aggregation's RHS at the small channel
        # width); bf16 MXU inputs, f32 accumulation; combine == relu.
        xw = jnp.dot(h_bf16, w_ref[...], preferred_element_type=jnp.float32)
        p = jnp.dot(a, xw.astype(jnp.bfloat16),
                    preferred_element_type=jnp.float32) + b_ref[...]
        return jnp.maximum(p, 0.0).astype(out_dtype)

    # TODO(synk): train-mode dropout (pltpu.prng_* Bernoulli mask) not emitted; eval-mode identity.
    h = layer(h, w1_ref, b1_ref, jnp.bfloat16)
    h = layer(h, w2_ref, b2_ref, jnp.bfloat16)
    out_ref[...] = layer(h, w3_ref, b3_ref, jnp.float32)


def _cgnn_fused(a_bf16, x, params):
    w1, b1, w2, b2, w3, b3 = params
    n = x.shape[0]
    c_out = w3.shape[1]
    vmem = pl.BlockSpec(memory_space=pltpu.MemorySpace.VMEM)
    nbytes = (a_bf16.size * 2 + x.size * 4
              + sum(int(p.size) * p.dtype.itemsize for p in params)
              + n * c_out * 4)
    return pl.pallas_call(
        cgnn_fused_kernel,
        out_shape=jax.ShapeDtypeStruct((n, c_out), jnp.float32),
        in_specs=[vmem] * 8,
        out_specs=vmem,
        compiler_params=pltpu.CompilerParams(vmem_limit_bytes=_vmem_limit(nbytes)),
    )(a_bf16, x, w1, b1, w2, b2, w3, b3)


# --------------------------- X @ W (once per layer) ---------------------------
def xw_kernel(h_ref, w_ref, xw_ref):
    # (TM, Cin) @ (Cin, Cout) -> bf16 (TM, Cout); f32 MXU accumulation.
    xw_ref[...] = jnp.dot(h_ref[...], w_ref[...],
                          preferred_element_type=jnp.float32).astype(xw_ref.dtype)


def _xw_tiled(h_bf16, w_bf16, tm):
    n, c_in = h_bf16.shape
    c_out = w_bf16.shape[1]
    nbytes = 2 * tm * c_in * 2 + c_in * c_out * 2 + 2 * tm * c_out * 2
    return pl.pallas_call(
        xw_kernel,
        out_shape=jax.ShapeDtypeStruct((n, c_out), jnp.bfloat16),
        grid=(n // tm,),
        in_specs=[
            pl.BlockSpec((tm, c_in), lambda i: (i, 0)),
            pl.BlockSpec((c_in, c_out), lambda i: (0, 0)),
        ],
        out_specs=pl.BlockSpec((tm, c_out), lambda i: (i, 0)),
        compiler_params=pltpu.CompilerParams(
            dimension_semantics=("parallel",),
            vmem_limit_bytes=_vmem_limit(nbytes)),
    )(h_bf16, w_bf16)


# ------------- aggregation A_hat @ XW, row- and K-tiled (scalable) ------------
def agg_kernel(a_ref, xw_ref, b_ref, o_ref, acc_ref):
    k = pl.program_id(1)

    @pl.when(k == 0)
    def _():
        acc_ref[...] = jnp.zeros_like(acc_ref)

    # Hot K loop: pure MXU accumulate (bf16 inputs, f32 accumulator).
    acc_ref[...] += jnp.dot(a_ref[...], xw_ref[...],
                            preferred_element_type=jnp.float32)

    # Bias + ReLU folded into the finalize step only.
    @pl.when(k == pl.num_programs(1) - 1)
    def _():
        o_ref[...] = jnp.maximum(acc_ref[...] + b_ref[...], 0.0).astype(o_ref.dtype)


def _gcn_layer_tiled(a_bf16, h_bf16, w_bf16, b_f32, *, tm, tk, out_dtype):
    n = a_bf16.shape[0]
    c_out = w_bf16.shape[1]
    xw = _xw_tiled(h_bf16, w_bf16, tm)          # (N, Cout) bf16, computed once
    out_bytes = jnp.dtype(out_dtype).itemsize
    nbytes = (2 * tm * tk * 2                   # double-buffered A tiles (bf16)
              + 2 * tk * c_out * 2              # double-buffered XW K-slabs (bf16)
              + 2 * c_out * 4                   # bias
              + 2 * tm * c_out * out_bytes      # double-buffered output tiles
              + tm * c_out * 4)                 # f32 accumulator scratch
    # NOTE: if the A-tile DMA is still exposed after K-tiling, raise the A spec
    # to pipeline_mode=pl.Buffered(3) (cheap on v5e/v6e's 128 MiB VMEM).
    return pl.pallas_call(
        agg_kernel,
        out_shape=jax.ShapeDtypeStruct((n, c_out), out_dtype),
        grid=(n // tm, n // tk),
        in_specs=[
            pl.BlockSpec((tm, tk), lambda i, k: (i, k)),       # A_hat tile
            pl.BlockSpec((tk, c_out), lambda i, k: (k, 0)),    # XW K-slab
            pl.BlockSpec((1, c_out), lambda i, k: (0, 0)),     # bias (f32)
        ],
        out_specs=pl.BlockSpec((tm, c_out), lambda i, k: (i, 0)),
        scratch_shapes=[pltpu.VMEM((tm, c_out), jnp.float32)],
        compiler_params=pltpu.CompilerParams(
            dimension_semantics=("parallel", "arbitrary"),     # rows shard on 2 TCs (v7x)
            vmem_limit_bytes=_vmem_limit(nbytes)),
    )(a_bf16, xw, b_f32)


# --------------------------------- forward ------------------------------------
def cgnn_forward(a_hat, x, params, *, row_tile=None, k_tile=None):
    """CGNN forward.  row_tile=None -> fused single kernel (small graphs);
    row_tile=TM (optionally k_tile=TK) -> row/K-tiled per-layer path."""
    w1, b1, w2, b2, w3, b3 = params
    n, in_c = x.shape
    hid_c = w1.shape[1]
    out_c = w3.shape[1]

    def pad2(m, r, c):
        return jnp.pad(m, ((0, r - m.shape[0]), (0, c - m.shape[1])))

    if row_tile is None:
        # Fused path: full-array VMEM blocks -> no (8,128) tiling constraint, so
        # only pad the output channels (lane-dense final store).
        out_p = _round_up(out_c, LANE)
        n_pad = _round_up(n, 8)
        a_p = pad2(a_hat.astype(jnp.float32), n_pad, n_pad).astype(jnp.bfloat16)
        x_p = pad2(x.astype(jnp.float32), n_pad, in_c)
        p_pad = (w1.astype(jnp.bfloat16), b1,
                 w2.astype(jnp.bfloat16), b2,
                 pad2(w3, hid_c, out_p).astype(jnp.bfloat16), pad2(b3, 1, out_p))
        out = _cgnn_fused(a_p, x_p, p_pad)
        return out[:n, :out_c]

    # Row/K-tiled path (large graphs).
    tm = row_tile
    tk = k_tile if k_tile is not None else row_tile
    in_p = _round_up(in_c, LANE)
    hid_p = _round_up(hid_c, LANE)
    out_p = _round_up(out_c, LANE)
    # Even row-tile count (v7x: 2 TensorCores on the "parallel" axis), and
    # divisible by the K tile.
    n_pad = _round_up(n, _lcm(2 * tm, tk))

    a_p = pad2(a_hat.astype(jnp.float32), n_pad, n_pad).astype(jnp.bfloat16)
    x_p = pad2(x, n_pad, in_p).astype(jnp.bfloat16)
    w1p = pad2(w1, in_p, hid_p).astype(jnp.bfloat16)
    w2p = pad2(w2, hid_p, hid_p).astype(jnp.bfloat16)
    w3p = pad2(w3, hid_p, out_p).astype(jnp.bfloat16)
    b1p = pad2(b1, 1, hid_p)        # biases stay f32: added into f32 accumulator
    b2p = pad2(b2, 1, hid_p)
    b3p = pad2(b3, 1, out_p)

    # NOTE: padded rows of h become relu(bias) != 0 after each layer; harmless
    # because the matching A_hat columns are zero and the final slice drops them.
    h = _gcn_layer_tiled(a_p, x_p, w1p, b1p, tm=tm, tk=tk, out_dtype=jnp.bfloat16)
    h = _gcn_layer_tiled(a_p, h, w2p, b2p, tm=tm, tk=tk, out_dtype=jnp.bfloat16)
    out = _gcn_layer_tiled(a_p, h, w3p, b3p, tm=tm, tk=tk, out_dtype=jnp.float32)
    return out[:n, :out_c]


# ------------------------------ JAX glue --------------------------------------
def build_gcn_norm_adj(edge_index, num_nodes):
    """Dense GCN-normalized adjacency: D^-1/2 (A + I) D^-1/2 (PyG gcn_norm)."""
    src = edge_index[0]
    dst = edge_index[1]
    loop = jnp.arange(num_nodes, dtype=src.dtype)
    src = jnp.concatenate([src, loop])
    dst = jnp.concatenate([dst, loop])
    a = jnp.zeros((num_nodes, num_nodes), jnp.float32).at[dst, src].add(1.0)
    deg = a.sum(axis=1)
    dinv = jnp.where(deg > 0.0, lax.rsqrt(deg), 0.0)
    return a * dinv[:, None] * dinv[None, :]


def glorot(key, fan_in, fan_out):
    limit = jnp.sqrt(6.0 / (fan_in + fan_out))
    return jax.random.uniform(key, (fan_in, fan_out), jnp.float32, -limit, limit)


def init_params(key, in_channels, hidden_channels, out_channels):
    k1, k2, k3 = jax.random.split(key, 3)
    w1 = glorot(k1, in_channels, hidden_channels)
    b1 = jnp.zeros((1, hidden_channels), jnp.float32)
    w2 = glorot(k2, hidden_channels, hidden_channels)
    b2 = jnp.zeros((1, hidden_channels), jnp.float32)
    w3 = glorot(k3, hidden_channels, out_channels)
    b3 = jnp.zeros((1, out_channels), jnp.float32)
    # self.mlp (Linear(out, out)) and temperature are unused in forward() -> omitted.
    return (w1, b1, w2, b2, w3, b3)


# ------------------------------ main -------------------------------------------
if __name__ == "__main__":
    N, E = 128, 512
    IN_C, HID_C, OUT_C = 32, 32, 16

    key = jax.random.PRNGKey(0)
    kx, ke1, ke2, kp, kx2, ke3, ke4 = jax.random.split(key, 7)

    # node features + random directed edge_index (self-loops added by gcn_norm)
    x = jax.random.normal(kx, (N, IN_C), jnp.float32)
    src = jax.random.randint(ke1, (E,), 0, N, jnp.int32)
    off = jax.random.randint(ke2, (E,), 1, N, jnp.int32)
    dst = (src + off) % N
    edge_index = jnp.stack([src, dst], axis=0)

    a_hat = build_gcn_norm_adj(edge_index, N)
    params = init_params(kp, IN_C, HID_C, OUT_C)

    # pure-JAX f32 reference of the same math
    def ref(a, h, p):
        w1, b1, w2, b2, w3, b3 = p
        h = jnp.maximum(a @ (h @ w1) + b1, 0.0)
        h = jnp.maximum(a @ (h @ w2) + b2, 0.0)
        h = jnp.maximum(a @ (h @ w3) + b3, 0.0)
        return h

    # ---- fused single-kernel path (shipped size) ----
    out = cgnn_forward(a_hat, x, params)
    jax.block_until_ready(out)
    ref_out = ref(a_hat, x, params)
    assert out.shape == (N, OUT_C)
    assert jnp.allclose(out, ref_out, atol=5e-2, rtol=5e-2), \
        float(jnp.max(jnp.abs(out - ref_out)))

    # ---- row/K-tiled per-layer path (large-graph / v7x 2-TC path) ----
    N2, E2 = 512, 4096
    x2 = jax.random.normal(kx2, (N2, IN_C), jnp.float32)
    src2 = jax.random.randint(ke3, (E2,), 0, N2, jnp.int32)
    off2 = jax.random.randint(ke4, (E2,), 1, N2, jnp.int32)
    dst2 = (src2 + off2) % N2
    a_hat2 = build_gcn_norm_adj(jnp.stack([src2, dst2], 0), N2)

    out2 = cgnn_forward(a_hat2, x2, params, row_tile=256, k_tile=256)
    jax.block_until_ready(out2)
    ref2 = ref(a_hat2, x2, params)
    assert out2.shape == (N2, OUT_C)
    assert jnp.allclose(out2, ref2, atol=5e-2, rtol=5e-2), \
        float(jnp.max(jnp.abs(out2 - ref2)))

    print("KERNEL_OK")
</pallas_src>

<mosaic_0001>
module attributes {stable_mosaic.version = 11 : i64} {
  func.func @cgnn_fused_kernel(%arg0: memref<128x128xbf16, #tpu.memory_space<vmem>>, %arg1: memref<128x32xf32, #tpu.memory_space<vmem>>, %arg2: memref<32x32xbf16, #tpu.memory_space<vmem>>, %arg3: memref<1x32xf32, #tpu.memory_space<vmem>>, %arg4: memref<32x32xbf16, #tpu.memory_space<vmem>>, %arg5: memref<1x32xf32, #tpu.memory_space<vmem>>, %arg6: memref<32x128xbf16, #tpu.memory_space<vmem>>, %arg7: memref<1x128xf32, #tpu.memory_space<vmem>>, %arg8: memref<128x128xf32, #tpu.memory_space<vmem>>) attributes {dimension_semantics = [], scalar_prefetch = 0 : i64, scratch_operands = 0 : i64, tpu.core_type = #tpu.core_type<tc>} {
    %c0 = arith.constant 0 : index
    %c0_0 = arith.constant 0 : index
    %0 = vector.load %arg0[%c0, %c0_0] : memref<128x128xbf16, #tpu.memory_space<vmem>>, vector<128x128xbf16>
    %c0_1 = arith.constant 0 : index
    %c0_2 = arith.constant 0 : index
    %1 = vector.load %arg1[%c0_1, %c0_2] : memref<128x32xf32, #tpu.memory_space<vmem>>, vector<128x32xf32>
    %2 = arith.truncf %1 : vector<128x32xf32> to vector<128x32xbf16>
    %c0_3 = arith.constant 0 : index
    %c0_4 = arith.constant 0 : index
    %3 = vector.load %arg2[%c0_3, %c0_4] : memref<32x32xbf16, #tpu.memory_space<vmem>>, vector<32x32xbf16>
    %cst = arith.constant dense<0.000000e+00> : vector<128x32xf32>
    %4 = tpu.matmul %2, %3, %cst {dimension_numbers = #tpu.dot_dimension_numbers<[1], [0], [0], [1], [0, 0, 1, 1], [], []>} : vector<128x32xbf16>, vector<32x32xbf16>, vector<128x32xf32> -> vector<128x32xf32>
    %5 = arith.truncf %4 : vector<128x32xf32> to vector<128x32xbf16>
    %cst_5 = arith.constant dense<0.000000e+00> : vector<128x32xf32>
    %6 = tpu.matmul %0, %5, %cst_5 {dimension_numbers = #tpu.dot_dimension_numbers<[1], [0], [0], [1], [0, 0, 1, 1], [], []>} : vector<128x128xbf16>, vector<128x32xbf16>, vector<128x32xf32> -> vector<128x32xf32>
    %c0_6 = arith.constant 0 : index
    %c0_7 = arith.constant 0 : index
    %7 = vector.load %arg3[%c0_6, %c0_7] : memref<1x32xf32, #tpu.memory_space<vmem>>, vector<1x32xf32>
    %8 = vector.broadcast %7 : vector<1x32xf32> to vector<128x32xf32>
    %9 = arith.addf %6, %8 : vector<128x32xf32>
    %cst_8 = arith.constant 0.000000e+00 : f32
    %10 = vector.broadcast %cst_8 : f32 to vector<128x32xf32>
    %11 = arith.maximumf %9, %10 : vector<128x32xf32>
    %12 = arith.truncf %11 : vector<128x32xf32> to vector<128x32xbf16>
    %c0_9 = arith.constant 0 : index
    %c0_10 = arith.constant 0 : index
    %13 = vector.load %arg4[%c0_9, %c0_10] : memref<32x32xbf16, #tpu.memory_space<vmem>>, vector<32x32xbf16>
    %cst_11 = arith.constant dense<0.000000e+00> : vector<128x32xf32>
    %14 = tpu.matmul %12, %13, %cst_11 {dimension_numbers = #tpu.dot_dimension_numbers<[1], [0], [0], [1], [0, 0, 1, 1], [], []>} : vector<128x32xbf16>, vector<32x32xbf16>, vector<128x32xf32> -> vector<128x32xf32>
    %15 = arith.truncf %14 : vector<128x32xf32> to vector<128x32xbf16>
    %cst_12 = arith.constant dense<0.000000e+00> : vector<128x32xf32>
    %16 = tpu.matmul %0, %15, %cst_12 {dimension_numbers = #tpu.dot_dimension_numbers<[1], [0], [0], [1], [0, 0, 1, 1], [], []>} : vector<128x128xbf16>, vector<128x32xbf16>, vector<128x32xf32> -> vector<128x32xf32>
    %c0_13 = arith.constant 0 : index
    %c0_14 = arith.constant 0 : index
    %17 = vector.load %arg5[%c0_13, %c0_14] : memref<1x32xf32, #tpu.memory_space<vmem>>, vector<1x32xf32>
    %18 = vector.broadcast %17 : vector<1x32xf32> to vector<128x32xf32>
    %19 = arith.addf %16, %18 : vector<128x32xf32>
    %cst_15 = arith.constant 0.000000e+00 : f32
    %20 = vector.broadcast %cst_15 : f32 to vector<128x32xf32>
    %21 = arith.maximumf %19, %20 : vector<128x32xf32>
    %22 = arith.truncf %21 : vector<128x32xf32> to vector<128x32xbf16>
    %c0_16 = arith.constant 0 : index
    %c0_17 = arith.constant 0 : index
    %23 = vector.load %arg6[%c0_16, %c0_17] : memref<32x128xbf16, #tpu.memory_space<vmem>>, vector<32x128xbf16>
    %cst_18 = arith.constant dense<0.000000e+00> : vector<128x128xf32>
    %24 = tpu.matmul %22, %23, %cst_18 {dimension_numbers = #tpu.dot_dimension_numbers<[1], [0], [0], [1], [0, 0, 1, 1], [], []>} : vector<128x32xbf16>, vector<32x128xbf16>, vector<128x128xf32> -> vector<128x128xf32>
    %25 = arith.truncf %24 : vector<128x128xf32> to vector<128x128xbf16>
    %cst_19 = arith.constant dense<0.000000e+00> : vector<128x128xf32>
    %26 = tpu.matmul %0, %25, %cst_19 {dimension_numbers = #tpu.dot_dimension_numbers<[1], [0], [0], [1], [0, 0, 1, 1], [], []>} : vector<128x128xbf16>, vector<128x128xbf16>, vector<128x128xf32> -> vector<128x128xf32>
    %c0_20 = arith.constant 0 : index
    %c0_21 = arith.constant 0 : index
    %27 = vector.load %arg7[%c0_20, %c0_21] : memref<1x128xf32, #tpu.memory_space<vmem>>, vector<1x128xf32>
    %28 = vector.broadcast %27 : vector<1x128xf32> to vector<128x128xf32>
    %29 = arith.addf %26, %28 : vector<128x128xf32>
    %cst_22 = arith.constant 0.000000e+00 : f32
    %30 = vector.broadcast %cst_22 : f32 to vector<128x128xf32>
    %31 = arith.maximumf %29, %30 : vector<128x128xf32>
    %c0_23 = arith.constant 0 : index
    %c0_24 = arith.constant 0 : index
    %32 = vector.load %arg8[%c0_23, %c0_24] : memref<128x128xf32, #tpu.memory_space<vmem>>, vector<128x128xf32>
    tpu.vector_store %arg8[%c0_23, %c0_24], %31 {strides = array<i32>} : memref<128x128xf32, #tpu.memory_space<vmem>>, vector<128x128xf32>,
    return
  }
}

</mosaic_0001>

<llo_original>
// kernel: tpu_custom_call.1
$region0: #{tpu_custom_call.1}
  #allocation0 [shape = 'u32[]', space=smem, size = 0x4, offset = 0x4, fixed_abs, tag = 'smem constant byte address 0x4 - core index']
  #allocation1 [shape = 'u32[144,128]{1,0:T(1,128)}', space=vmem, size = 0x12000, scoped, tag = 'internal scratch']
  %s0 = inlined_call_operand.vmem [shape: bf16[128,128], index: 0, kind: input, shape index: {}]
  %s1 = inlined_call_operand.vmem [shape: f32[128,32], index: 1, kind: input, shape index: {}]
  %s2 = inlined_call_operand.vmem [shape: bf16[32,32], index: 2, kind: input, shape index: {}]
  %s3 = inlined_call_operand.vmem [shape: f32[1,32], index: 3, kind: input, shape index: {}]
  %s4 = inlined_call_operand.vmem [shape: bf16[32,32], index: 4, kind: input, shape index: {}]
  %s5 = inlined_call_operand.vmem [shape: f32[1,32], index: 5, kind: input, shape index: {}]
  %s6 = inlined_call_operand.vmem [shape: bf16[32,128], index: 6, kind: input, shape index: {}]
  %s7 = inlined_call_operand.vmem [shape: f32[1,128], index: 7, kind: input, shape index: {}]
  %s8 = inlined_call_operand.hbm [shape: f32[128,128], index: 8, kind: output, shape index: {}]
  %s9 = sld [smem:[#allocation0]]
  $region42: #{tpu_custom_call.1} parent=0
    _
  %s11 = ssub.s32 1, %s9
  %s12 = scalar_select 0, %s11, %s9
  $region1: #{tpu_custom_call.1} parent=0
    #allocation2 [shape = 'u8[65536]{0}', space=vmem, size = 0x10000, scoped, tag = 'output window, operand 0, single buffered']
    #allocation3 [shape = 's32[1]{0}', space=sflag, size = 0x4, scoped, tag = 'scoped memory for tpu_custom_call.1']
    %13 = vsyncpa [#allocation3], 0
    // Predicated region
    $region2: #{tpu_custom_call.1} parent=1 // pred_check
      _
    $region3: #{tpu_custom_call.1} parent=1 // pred_check_branch
      %15 = sbr.rel (0) target = $region5
    $region4: #{tpu_custom_call.1} parent=1 // pred_region
      _
    $region5: #{tpu_custom_call.1} parent=1 // pred_fallthru
      _
    // Predicated region
    $region6: #{tpu_custom_call.1} parent=1 // pred_check
      _
    $region7: #{tpu_custom_call.1} parent=1 // pred_check_branch
      %17 = sbr.rel (0) target = $region9
    $region8: #{tpu_custom_call.1} parent=1 // pred_region
      _
    $region9: #{tpu_custom_call.1} parent=1 // pred_fallthru
      _
    // Predicated region
    $region10: #{tpu_custom_call.1} parent=1 // pred_check
      _
    $region11: #{tpu_custom_call.1} parent=1 // pred_check_branch
      %19 = sbr.rel (0) target = $region13
    $region12: #{tpu_custom_call.1} parent=1 // pred_region
      _
    $region13: #{tpu_custom_call.1} parent=1 // pred_fallthru
      _
    // Predicated region
    $region14: #{tpu_custom_call.1} parent=1 // pred_check
      _
    $region15: #{tpu_custom_call.1} parent=1 // pred_check_branch
      %21 = sbr.rel (0) target = $region17
    $region16: #{tpu_custom_call.1} parent=1 // pred_region
      _
    $region17: #{tpu_custom_call.1} parent=1 // pred_fallthru
      _
    // Predicated region
    $region18: #{tpu_custom_call.1} parent=1 // pred_check
      _
    $region19: #{tpu_custom_call.1} parent=1 // pred_check_branch
      %23 = sbr.rel (0) target = $region21
    $region20: #{tpu_custom_call.1} parent=1 // pred_region
      _
    $region21: #{tpu_custom_call.1} parent=1 // pred_fallthru
      _
    // Predicated region
    $region22: #{tpu_custom_call.1} parent=1 // pred_check
      _
    $region23: #{tpu_custom_call.1} parent=1 // pred_check_branch
      %25 = sbr.rel (0) target = $region25
    $region24: #{tpu_custom_call.1} parent=1 // pred_region
      _
    $region25: #{tpu_custom_call.1} parent=1 // pred_fallthru
      _
    // Predicated region
    $region26: #{tpu_custom_call.1} parent=1 // pred_check
      _
    $region27: #{tpu_custom_call.1} parent=1 // pred_check_branch
      %27 = sbr.rel (0) target = $region29
    $region28: #{tpu_custom_call.1} parent=1 // pred_region
      _
    $region29: #{tpu_custom_call.1} parent=1 // pred_fallthru
      _
    // Predicated region
    $region30: #{tpu_custom_call.1} parent=1 // pred_check
      _
    $region31: #{tpu_custom_call.1} parent=1 // pred_check_branch
      %29 = sbr.rel (0) target = $region33
    $region32: #{tpu_custom_call.1} parent=1 // pred_region
      _
    $region33: #{tpu_custom_call.1} parent=1 // pred_fallthru
      _
    %v31 = vld [vmem:[%s0] sm:$0xf]
    %v32 = vld [vmem:[%s0 + $0x4] sm:$0xf]
    %v33 = vld [vmem:[%s0 + $0x8] sm:$0xf]
    %v34 = vld [vmem:[%s0 + $0xc] sm:$0xf]
    %v35 = vld [vmem:[%s0 + $0x10] sm:$0xf]
    %v36 = vld [vmem:[%s0 + $0x14] sm:$0xf]
    %v37 = vld [vmem:[%s0 + $0x18] sm:$0xf]
    %v38 = vld [vmem:[%s0 + $0x1c] sm:$0xf]
    %v39 = vld [vmem:[%s0 + $0x20] sm:$0xf]
    %v40 = vld [vmem:[%s0 + $0x24] sm:$0xf]
    %v41 = vld [vmem:[%s0 + $0x28] sm:$0xf]
    %v42 = vld [vmem:[%s0 + $0x2c] sm:$0xf]
    %v43 = vld [vmem:[%s0 + $0x30] sm:$0xf]
    %v44 = vld [vmem:[%s0 + $0x34] sm:$0xf]
    %v45 = vld [vmem:[%s0 + $0x38] sm:$0xf]
    %v46 = vld [vmem:[%s0 + $0x3c] sm:$0xf]
    %v47 = vld [vmem:[%s1] sm:$0xff]
    %v48 = vld [vmem:[%s1 + $0x8] sm:$0xff]
    %v49 = vld [vmem:[%s1 + $0x10] sm:$0xff]
    %v50 = vld [vmem:[%s1 + $0x18] sm:$0xff]
    %v51 = vld [vmem:[%s1 + $0x20] sm:$0xff]
    %v52 = vld [vmem:[%s1 + $0x28] sm:$0xff]
    %v53 = vld [vmem:[%s1 + $0x30] sm:$0xff]
    %v54 = vld [vmem:[%s1 + $0x38] sm:$0xff]
    %v55 = vld [vmem:[%s1 + $0x40] sm:$0xff]
    %v56 = vld [vmem:[%s1 + $0x48] sm:$0xff]
    %v57 = vld [vmem:[%s1 + $0x50] sm:$0xff]
    %v58 = vld [vmem:[%s1 + $0x58] sm:$0xff]
    %v59 = vld [vmem:[%s1 + $0x60] sm:$0xff]
    %v60 = vld [vmem:[%s1 + $0x68] sm:$0xff]
    %v61 = vld [vmem:[%s1 + $0x70] sm:$0xff]
    %v62 = vld [vmem:[%s1 + $0x78] sm:$0xff]
    %v63 = vpack.c.bf16 %v48, %v47
    %v64 = vpack.c.bf16 %v50, %v49
    %v65 = vpack.c.bf16 %v52, %v51
    %v66 = vpack.c.bf16 %v54, %v53
    %v67 = vpack.c.bf16 %v56, %v55
    %v68 = vpack.c.bf16 %v58, %v57
    %v69 = vpack.c.bf16 %v60, %v59
    %v70 = vpack.c.bf16 %v62, %v61
    %v71 = vld [vmem:[%s2] sm:$0xf]
    %v72 = vld [vmem:[%s2 + $0x4] sm:$0xf]
    %v73 = vld [vmem:[%s2 + $0x8] sm:$0xf]
    %v74 = vld [vmem:[%s2 + $0xc] sm:$0xf]
    %v79 = vunpack.c.l.b16 %v71
    %v80 = vunpack.c.l.b16 %v72
    %v81 = vunpack.c.l.b16 %v73
    %v82 = vunpack.c.l.b16 %v74
    %v83 = vpack.c.b16 %v80, %v79
    %v84 = vpack.c.b16 %v82, %v81
    %vm87 = vcmask 261120
    %v89 = vsel %vm87, %v63, 0
    %v92 = vsel %vm87, %v64, 0
    %v95 = vsel %vm87, %v65, 0
    %v98 = vsel %vm87, %v66, 0
    %v101 = vsel %vm87, %v67, 0
    %v104 = vsel %vm87, %v68, 0
    %v107 = vsel %vm87, %v69, 0
    %v110 = vsel %vm87, %v70, 0
    %112 = vmatprep.subr.bf16.mxu0 0
    %113 = vmatpush1.bf16.msra.mxu0 %v83
    %114 = vmatprep.subr.bf16.mxu0 0
    %115 = vmatpush1.bf16.msra.mxu0 %v84
    %116 = vmatprep.subr.bf16.mxu0 0
    %117 = vmatpush1.bf16.msra.mxu0 0
    %118 = vmatprep.subr.bf16.mxu0 0
    %119 = vmatpush1.bf16.msra.mxu0 0
    %120 = vmatprep.subr.bf16.mxu0 0
    %121 = vmatpush1.bf16.msra.mxu0 0
    %122 = vmatprep.subr.bf16.mxu0 0
    %123 = vmatpush1.bf16.msra.mxu0 0
    %124 = vmatprep.subr.bf16.mxu0 0
    %125 = vmatpush1.bf16.msra.mxu0 0
    %126 = vmatprep.subr.bf16.mxu0 0
    %127 = vmatpush1.bf16.msra.mxu0 0
    %128 = vmatprep.subr.bf16.mxu0 0
    %129 = vmatpush1.bf16.msra.mxu0 0
    %130 = vmatprep.subr.bf16.mxu0 0
    %131 = vmatpush1.bf16.msra.mxu0 0
    %132 = vmatprep.subr.bf16.mxu0 0
    %133 = vmatpush1.bf16.msra.mxu0 0
    %134 = vmatprep.subr.bf16.mxu0 0
    %135 = vmatpush1.bf16.msra.mxu0 0
    %136 = vmatprep.subr.bf16.mxu0 0
    %137 = vmatpush1.bf16.msra.mxu0 0
    %138 = vmatprep.subr.bf16.mxu0 0
    %139 = vmatpush1.bf16.msra.mxu0 0
    %140 = vmatprep.subr.bf16.mxu0 0
    %141 = vmatpush1.bf16.msra.mxu0 0
    %142 = vmatprep.subr.bf16.mxu0 0
    %143 = vmatpush1.bf16.msra.mxu0 0
    %144 = vmatprep.mubr.bf16.mxu0 0
    %145 = vmatmul.mubr.bf16.gmra.mrb[0].mxu0 %v89
    %v146 = vpop.f32.mrb[0].mxu0
    %v147 = vadd.f32 0.0, %v146
    %v148 = vpop.f32.mrb[0].mxu0
    %v149 = vpop.f32.mrb[0].mxu0
    %v150 = vadd.f32 0.0, %v149
    %v151 = vpop.f32.mrb[0].mxu0
    %152 = vmatprep.mubr.bf16.mxu0 0
    %153 = vmatmul.mubr.bf16.gmra.mrb[0].mxu0 %v92
    %v154 = vpop.f32.mrb[0].mxu0
    %v155 = vadd.f32 0.0, %v154
    %v156 = vpop.f32.mrb[0].mxu0
    %v157 = vpop.f32.mrb[0].mxu0
    %v158 = vadd.f32 0.0, %v157
    %v159 = vpop.f32.mrb[0].mxu0
    %160 = vmatprep.mubr.bf16.mxu0 0
    %161 = vmatmul.mubr.bf16.gmra.mrb[0].mxu0 %v95
    %v162 = vpop.f32.mrb[0].mxu0
    %v163 = vadd.f32 0.0, %v162
    %v164 = vpop.f32.mrb[0].mxu0
    %v165 = vpop.f32.mrb[0].mxu0
    %v166 = vadd.f32 0.0, %v165
    %v167 = vpop.f32.mrb[0].mxu0
    %168 = vmatprep.mubr.bf16.mxu0 0
    %169 = vmatmul.mubr.bf16.gmra.mrb[0].mxu0 %v98
    %v170 = vpop.f32.mrb[0].mxu0
    %v171 = vadd.f32 0.0, %v170
    %v172 = vpop.f32.mrb[0].mxu0
    %v173 = vpop.f32.mrb[0].mxu0
    %v174 = vadd.f32 0.0, %v173
    %v175 = vpop.f32.mrb[0].mxu0
    %176 = vmatprep.mubr.bf16.mxu0 0
    %177 = vmatmul.mubr.bf16.gmra.mrb[0].mxu0 %v101
    %v178 = vpop.f32.mrb[0].mxu0
    %v179 = vadd.f32 0.0, %v178
    %v180 = vpop.f32.mrb[0].mxu0
    %v181 = vpop.f32.mrb[0].mxu0
    %v182 = vadd.f32 0.0, %v181
    %v183 = vpop.f32.mrb[0].mxu0
    %184 = vmatprep.mubr.bf16.mxu0 0
    %185 = vmatmul.mubr.bf16.gmra.mrb[0].mxu0 %v104
    %v186 = vpop.f32.mrb[0].mxu0
    %v187 = vadd.f32 0.0, %v186
    %v188 = vpop.f32.mrb[0].mxu0
    %v189 = vpop.f32.mrb[0].mxu0
    %v190 = vadd.f32 0.0, %v189
    %v191 = vpop.f32.mrb[0].mxu0
    %192 = vmatprep.mubr.bf16.mxu0 0
    %193 = vmatmul.mubr.bf16.gmra.mrb[0].mxu0 %v107
    %v194 = vpop.f32.mrb[0].mxu0
    %v195 = vadd.f32 0.0, %v194
    %v196 = vpop.f32.mrb[0].mxu0
    %v197 = vpop.f32.mrb[0].mxu0
    %v198 = vadd.f32 0.0, %v197
    %v199 = vpop.f32.mrb[0].mxu0
    %200 = vmatprep.mubr.bf16.mxu0 0
    %201 = vmatmul.mubr.bf16.gmra.mrb[0].mxu0 %v110
    %v202 = vpop.f32.mrb[0].mxu0
    %v203 = vadd.f32 0.0, %v202
    %v204 = vpop.f32.mrb[0].mxu0
    %v205 = vpop.f32.mrb[0].mxu0
    %v206 = vadd.f32 0.0, %v205
    %v207 = vpop.f32.mrb[0].mxu0
    %208 = vdwg.mxu0
    %v209 = vpack.c.bf16 %v150, %v147
    %v210 = vpack.c.bf16 %v158, %v155
    %v211 = vpack.c.bf16 %v166, %v163
    %v212 = vpack.c.bf16 %v174, %v171
    %v213 = vpack.c.bf16 %v182, %v179
    %v214 = vpack.c.bf16 %v190, %v187
    %v215 = vpack.c.bf16 %v198, %v195
    %v216 = vpack.c.bf16 %v206, %v203
    %v217 = vld [vmem:[%s3] sm:$0x1]
    %v219 = vlaneseq
    %v220 = vshrl.u32 %v219, 7
    %v221 = vsub.s32 0, %v220
    %v222 = vrot.slane %v217, %v221
    %v240 = vunpack.c.l.b16 %v31
    %v241 = vunpack.c.l.b16 %v32
    %v242 = vunpack.c.l.b16 %v33
    %v243 = vunpack.c.l.b16 %v34
    %v244 = vunpack.c.l.b16 %v35
    %v245 = vunpack.c.l.b16 %v36
    %v246 = vunpack.c.l.b16 %v37
    %v247 = vunpack.c.l.b16 %v38
    %v248 = vunpack.c.l.b16 %v39
    %v249 = vunpack.c.l.b16 %v40
    %v250 = vunpack.c.l.b16 %v41
    %v251 = vunpack.c.l.b16 %v42
    %v252 = vunpack.c.l.b16 %v43
    %v253 = vunpack.c.l.b16 %v44
    %v254 = vunpack.c.l.b16 %v45
    %v255 = vunpack.c.l.b16 %v46
    %v256 = vpack.c.b16 %v241, %v240
    %v257 = vpack.c.b16 %v243, %v242
    %v258 = vpack.c.b16 %v245, %v244
    %v259 = vpack.c.b16 %v247, %v246
    %v260 = vpack.c.b16 %v249, %v248
    %v261 = vpack.c.b16 %v251, %v250
    %v262 = vpack.c.b16 %v253, %v252
    %v263 = vpack.c.b16 %v255, %v254
    %272 = vmatprep.subr.bf16.mxu0 0
    %273 = vmatpush1.bf16.msra.mxu0 %v209
    %274 = vmatprep.subr.bf16.mxu0 0
    %275 = vmatpush1.bf16.msra.mxu0 %v210
    %276 = vmatprep.subr.bf16.mxu0 0
    %277 = vmatpush1.bf16.msra.mxu0 %v211
    %278 = vmatprep.subr.bf16.mxu0 0
    %279 = vmatpush1.bf16.msra.mxu0 %v212
    %280 = vmatprep.subr.bf16.mxu0 0
    %281 = vmatpush1.bf16.msra.mxu0 %v213
    %282 = vmatprep.subr.bf16.mxu0 0
    %283 = vmatpush1.bf16.msra.mxu0 %v214
    %284 = vmatprep.subr.bf16.mxu0 0
    %285 = vmatpush1.bf16.msra.mxu0 %v215
    %286 = vmatprep.subr.bf16.mxu0 0
    %287 = vmatpush1.bf16.msra.mxu0 %v216
    %288 = vmatprep.subr.bf16.mxu0 0
    %289 = vmatpush1.bf16.msra.mxu0 0
    %290 = vmatprep.subr.bf16.mxu0 0
    %291 = vmatpush1.bf16.msra.mxu0 0
    %292 = vmatprep.subr.bf16.mxu0 0
    %293 = vmatpush1.bf16.msra.mxu0 0
    %294 = vmatprep.subr.bf16.mxu0 0
    %295 = vmatpush1.bf16.msra.mxu0 0
    %296 = vmatprep.subr.bf16.mxu0 0
    %297 = vmatpush1.bf16.msra.mxu0 0
    %298 = vmatprep.subr.bf16.mxu0 0
    %299 = vmatpush1.bf16.msra.mxu0 0
    %300 = vmatprep.subr.bf16.mxu0 0
    %301 = vmatpush1.bf16.msra.mxu0 0
    %302 = vmatprep.subr.bf16.mxu0 0
    %303 = vmatpush1.bf16.msra.mxu0 0
    %304 = vmatprep.mubr.bf16.mxu0 0
    %305 = vmatmul.mubr.bf16.gmra.mrb[0].mxu0 %v256
    %v306 = vpop.f32.mrb[0].mxu0
    %v307 = vadd.f32 %v222, %v306
    %v308 = vpop.f32.mrb[0].mxu0
    %v309 = vpop.f32.mrb[0].mxu0
    %v310 = vadd.f32 %v222, %v309
    %v311 = vpop.f32.mrb[0].mxu0
    %312 = vmatprep.mubr.bf16.mxu0 0
    %313 = vmatmul.mubr.bf16.gmra.mrb[0].mxu0 %v257
    %v314 = vpop.f32.mrb[0].mxu0
    %v315 = vadd.f32 %v222, %v314
    %v316 = vpop.f32.mrb[0].mxu0
    %v317 = vpop.f32.mrb[0].mxu0
    %v318 = vadd.f32 %v222, %v317
    %v319 = vpop.f32.mrb[0].mxu0
    %320 = vmatprep.mubr.bf16.mxu0 0
    %321 = vmatmul.mubr.bf16.gmra.mrb[0].mxu0 %v258
    %v322 = vpop.f32.mrb[0].mxu0
    %v323 = vadd.f32 %v222, %v322
    %v324 = vpop.f32.mrb[0].mxu0
    %v325 = vpop.f32.mrb[0].mxu0
    %v326 = vadd.f32 %v222, %v325
    %v327 = vpop.f32.mrb[0].mxu0
    %328 = vmatprep.mubr.bf16.mxu0 0
    %329 = vmatmul.mubr.bf16.gmra.mrb[0].mxu0 %v259
    %v330 = vpop.f32.mrb[0].mxu0
    %v331 = vadd.f32 %v222, %v330
    %v332 = vpop.f32.mrb[0].mxu0
    %v333 = vpop.f32.mrb[0].mxu0
    %v334 = vadd.f32 %v222, %v333
    %v335 = vpop.f32.mrb[0].mxu0
    %336 = vmatprep.mubr.bf16.mxu0 0
    %337 = vmatmul.mubr.bf16.gmra.mrb[0].mxu0 %v260
    %v338 = vpop.f32.mrb[0].mxu0
    %v339 = vadd.f32 %v222, %v338
    %v340 = vpop.f32.mrb[0].mxu0
    %v341 = vpop.f32.mrb[0].mxu0
    %v342 = vadd.f32 %v222, %v341
    %v343 = vpop.f32.mrb[0].mxu0
    %344 = vmatprep.mubr.bf16.mxu0 0
    %345 = vmatmul.mubr.bf16.gmra.mrb[0].mxu0 %v261
    %v346 = vpop.f32.mrb[0].mxu0
    %v347 = vadd.f32 %v222, %v346
    %v348 = vpop.f32.mrb[0].mxu0
    %v349 = vpop.f32.mrb[0].mxu0
    %v350 = vadd.f32 %v222, %v349
    %v351 = vpop.f32.mrb[0].mxu0
    %352 = vmatprep.mubr.bf16.mxu0 0
    %353 = vmatmul.mubr.bf16.gmra.mrb[0].mxu0 %v262
    %v354 = vpop.f32.mrb[0].mxu0
    %v355 = vadd.f32 %v222, %v354
    %v356 = vpop.f32.mrb[0].mxu0
    %v357 = vpop.f32.mrb[0].mxu0
    %v358 = vadd.f32 %v222, %v357
    %v359 = vpop.f32.mrb[0].mxu0
    %360 = vmatprep.mubr.bf16.mxu0 0
    %361 = vmatmul.mubr.bf16.gmra.mrb[0].mxu0 %v263
    %v362 = vpop.f32.mrb[0].mxu0
    %v363 = vadd.f32 %v222, %v362
    %v364 = vpop.f32.mrb[0].mxu0
    %v365 = vpop.f32.mrb[0].mxu0
    %v366 = vadd.f32 %v222, %v365
    %v367 = vpop.f32.mrb[0].mxu0
    %368 = vdwg.mxu0
    %v369 = vmax.f32 %v307, 0.0
    %v370 = vmax.f32 %v310, 0.0
    %v371 = vmax.f32 %v315, 0.0
    %v372 = vmax.f32 %v318, 0.0
    %v373 = vmax.f32 %v323, 0.0
    %v374 = vmax.f32 %v326, 0.0
    %v375 = vmax.f32 %v331, 0.0
    %v376 = vmax.f32 %v334, 0.0
    %v377 = vmax.f32 %v339, 0.0
    %v378 = vmax.f32 %v342, 0.0
    %v379 = vmax.f32 %v347, 0.0
    %v380 = vmax.f32 %v350, 0.0
    %v381 = vmax.f32 %v355, 0.0
    %v382 = vmax.f32 %v358, 0.0
    %v383 = vmax.f32 %v363, 0.0
    %v384 = vmax.f32 %v366, 0.0
    %v385 = vpack.c.bf16 %v370, %v369
    %v386 = vpack.c.bf16 %v372, %v371
    %v387 = vpack.c.bf16 %v374, %v373
    %v388 = vpack.c.bf16 %v376, %v375
    %v389 = vpack.c.bf16 %v378, %v377
    %v390 = vpack.c.bf16 %v380, %v379
    %v391 = vpack.c.bf16 %v382, %v381
    %v392 = vpack.c.bf16 %v384, %v383
    %v393 = vld [vmem:[%s4] sm:$0xf]
    %v394 = vld [vmem:[%s4 + $0x4] sm:$0xf]
    %v395 = vld [vmem:[%s4 + $0x8] sm:$0xf]
    %v396 = vld [vmem:[%s4 + $0xc] sm:$0xf]
    %v401 = vunpack.c.l.b16 %v393
    %v402 = vunpack.c.l.b16 %v394
    %v403 = vunpack.c.l.b16 %v395
    %v404 = vunpack.c.l.b16 %v396
    %v405 = vpack.c.b16 %v402, %v401
    %v406 = vpack.c.b16 %v404, %v403
    %v410 = vsel %vm87, %v385, 0
    %v413 = vsel %vm87, %v386, 0
    %v416 = vsel %vm87, %v387, 0
    %v419 = vsel %vm87, %v388, 0
    %v422 = vsel %vm87, %v389, 0
    %v425 = vsel %vm87, %v390, 0
    %v428 = vsel %vm87, %v391, 0
    %v431 = vsel %vm87, %v392, 0
    %433 = vmatprep.subr.bf16.mxu0 0
    %434 = vmatpush1.bf16.msra.mxu0 %v405
    %435 = vmatprep.subr.bf16.mxu0 0
    %436 = vmatpush1.bf16.msra.mxu0 %v406
    %437 = vmatprep.subr.bf16.mxu0 0
    %438 = vmatpush1.bf16.msra.mxu0 0
    %439 = vmatprep.subr.bf16.mxu0 0
    %440 = vmatpush1.bf16.msra.mxu0 0
    %441 = vmatprep.subr.bf16.mxu0 0
    %442 = vmatpush1.bf16.msra.mxu0 0
    %443 = vmatprep.subr.bf16.mxu0 0
    %444 = vmatpush1.bf16.msra.mxu0 0
    %445 = vmatprep.subr.bf16.mxu0 0
    %446 = vmatpush1.bf16.msra.mxu0 0
    %447 = vmatprep.subr.bf16.mxu0 0
    %448 = vmatpush1.bf16.msra.mxu0 0
    %449 = vmatprep.subr.bf16.mxu0 0
    %450 = vmatpush1.bf16.msra.mxu0 0
    %451 = vmatprep.subr.bf16.mxu0 0
    %452 = vmatpush1.bf16.msra.mxu0 0
    %453 = vmatprep.subr.bf16.mxu0 0
    %454 = vmatpush1.bf16.msra.mxu0 0
    %455 = vmatprep.subr.bf16.mxu0 0
    %456 = vmatpush1.bf16.msra.mxu0 0
    %457 = vmatprep.subr.bf16.mxu0 0
    %458 = vmatpush1.bf16.msra.mxu0 0
    %459 = vmatprep.subr.bf16.mxu0 0
    %460 = vmatpush1.bf16.msra.mxu0 0
    %461 = vmatprep.subr.bf16.mxu0 0
    %462 = vmatpush1.bf16.msra.mxu0 0
    %463 = vmatprep.subr.bf16.mxu0 0
    %464 = vmatpush1.bf16.msra.mxu0 0
    %465 = vmatprep.mubr.bf16.mxu0 0
    %466 = vmatmul.mubr.bf16.gmra.mrb[0].mxu0 %v410
    %v467 = vpop.f32.mrb[0].mxu0
    %v468 = vadd.f32 0.0, %v467
    %v469 = vpop.f32.mrb[0].mxu0
    %v470 = vpop.f32.mrb[0].mxu0
    %v471 = vadd.f32 0.0, %v470
    %v472 = vpop.f32.mrb[0].mxu0
    %473 = vmatprep.mubr.bf16.mxu0 0
    %474 = vmatmul.mubr.bf16.gmra.mrb[0].mxu0 %v413
    %v475 = vpop.f32.mrb[0].mxu0
    %v476 = vadd.f32 0.0, %v475
    %v477 = vpop.f32.mrb[0].mxu0
    %v478 = vpop.f32.mrb[0].mxu0
    %v479 = vadd.f32 0.0, %v478
    %v480 = vpop.f32.mrb[0].mxu0
    %481 = vmatprep.mubr.bf16.mxu0 0
    %482 = vmatmul.mubr.bf16.gmra.mrb[0].mxu0 %v416
    %v483 = vpop.f32.mrb[0].mxu0
    %v484 = vadd.f32 0.0, %v483
    %v485 = vpop.f32.mrb[0].mxu0
    %v486 = vpop.f32.mrb[0].mxu0
    %v487 = vadd.f32 0.0, %v486
    %v488 = vpop.f32.mrb[0].mxu0
    %489 = vmatprep.mubr.bf16.mxu0 0
    %490 = vmatmul.mubr.bf16.gmra.mrb[0].mxu0 %v419
    %v491 = vpop.f32.mrb[0].mxu0
    %v492 = vadd.f32 0.0, %v491
    %v493 = vpop.f32.mrb[0].mxu0
    %v494 = vpop.f32.mrb[0].mxu0
    %v495 = vadd.f32 0.0, %v494
    %v496 = vpop.f32.mrb[0].mxu0
    %497 = vmatprep.mubr.bf16.mxu0 0
    %498 = vmatmul.mubr.bf16.gmra.mrb[0].mxu0 %v422
    %v499 = vpop.f32.mrb[0].mxu0
    %v500 = vadd.f32 0.0, %v499
    %v501 = vpop.f32.mrb[0].mxu0
    %v502 = vpop.f32.mrb[0].mxu0
    %v503 = vadd.f32 0.0, %v502
    %v504 = vpop.f32.mrb[0].mxu0
    %505 = vmatprep.mubr.bf16.mxu0 0
    %506 = vmatmul.mubr.bf16.gmra.mrb[0].mxu0 %v425
    %v507 = vpop.f32.mrb[0].mxu0
    %v508 = vadd.f32 0.0, %v507
    %v509 = vpop.f32.mrb[0].mxu0
    %v510 = vpop.f32.mrb[0].mxu0
    %v511 = vadd.f32 0.0, %v510
    %v512 = vpop.f32.mrb[0].mxu0
    %513 = vmatprep.mubr.bf16.mxu0 0
    %514 = vmatmul.mubr.bf16.gmra.mrb[0].mxu0 %v428
    %v515 = vpop.f32.mrb[0].mxu0
    %v516 = vadd.f32 0.0, %v515
    %v517 = vpop.f32.mrb[0].mxu0
    %v518 = vpop.f32.mrb[0].mxu0
    %v519 = vadd.f32 0.0, %v518
    %v520 = vpop.f32.mrb[0].mxu0
    %521 = vmatprep.mubr.bf16.mxu0 0
    %522 = vmatmul.mubr.bf16.gmra.mrb[0].mxu0 %v431
    %v523 = vpop.f32.mrb[0].mxu0
    %v524 = vadd.f32 0.0, %v523
    %v525 = vpop.f32.mrb[0].mxu0
    %v526 = vpop.f32.mrb[0].mxu0
    %v527 = vadd.f32 0.0, %v526
    %v528 = vpop.f32.mrb[0].mxu0
    %529 = vdwg.mxu0
    %v530 = vpack.c.bf16 %v471, %v468
    %v531 = vpack.c.bf16 %v479, %v476
    %v532 = vpack.c.bf16 %v487, %v484
    %v533 = vpack.c.bf16 %v495, %v492
    %v534 = vpack.c.bf16 %v503, %v500
    %v535 = vpack.c.bf16 %v511, %v508
    %v536 = vpack.c.bf16 %v519, %v516
    %v537 = vpack.c.bf16 %v527, %v524
    %v538 = vld [vmem:[%s5] sm:$0x1]
    %v540 = vlaneseq
    %v541 = vshrl.u32 %v540, 7
    %v542 = vsub.s32 0, %v541
    %v543 = vrot.slane %v538, %v542
    %545 = vmatprep.subr.bf16.mxu0 0
    %546 = vmatpush1.bf16.msra.mxu0 %v530
    %547 = vmatprep.subr.bf16.mxu0 0
    %548 = vmatpush1.bf16.msra.mxu0 %v531
    %549 = vmatprep.subr.bf16.mxu0 0
    %550 = vmatpush1.bf16.msra.mxu0 %v532
    %551 = vmatprep.subr.bf16.mxu0 0
    %552 = vmatpush1.bf16.msra.mxu0 %v533
    %553 = vmatprep.subr.bf16.mxu0 0
    %554 = vmatpush1.bf16.msra.mxu0 %v534
    %555 = vmatprep.subr.bf16.mxu0 0
    %556 = vmatpush1.bf16.msra.mxu0 %v535
    %557 = vmatprep.subr.bf16.mxu0 0
    %558 = vmatpush1.bf16.msra.mxu0 %v536
    %559 = vmatprep.subr.bf16.mxu0 0
    %560 = vmatpush1.bf16.msra.mxu0 %v537
    %561 = vmatprep.subr.bf16.mxu0 0
    %562 = vmatpush1.bf16.msra.mxu0 0
    %563 = vmatprep.subr.bf16.mxu0 0
    %564 = vmatpush1.bf16.msra.mxu0 0
    %565 = vmatprep.subr.bf16.mxu0 0
    %566 = vmatpush1.bf16.msra.mxu0 0
    %567 = vmatprep.subr.bf16.mxu0 0
    %568 = vmatpush1.bf16.msra.mxu0 0
    %569 = vmatprep.subr.bf16.mxu0 0
    %570 = vmatpush1.bf16.msra.mxu0 0
    %571 = vmatprep.subr.bf16.mxu0 0
    %572 = vmatpush1.bf16.msra.mxu0 0
    %573 = vmatprep.subr.bf16.mxu0 0
    %574 = vmatpush1.bf16.msra.mxu0 0
    %575 = vmatprep.subr.bf16.mxu0 0
    %576 = vmatpush1.bf16.msra.mxu0 0
    %577 = vmatprep.mubr.bf16.mxu0 0
    %578 = vmatmul.mubr.bf16.gmra.mrb[0].mxu0 %v256
    %v579 = vpop.f32.mrb[0].mxu0
    %v580 = vadd.f32 %v543, %v579
    %v581 = vpop.f32.mrb[0].mxu0
    %v582 = vpop.f32.mrb[0].mxu0
    %v583 = vadd.f32 %v543, %v582
    %v584 = vpop.f32.mrb[0].mxu0
    %585 = vmatprep.mubr.bf16.mxu0 0
    %586 = vmatmul.mubr.bf16.gmra.mrb[0].mxu0 %v257
    %v587 = vpop.f32.mrb[0].mxu0
    %v588 = vadd.f32 %v543, %v587
    %v589 = vpop.f32.mrb[0].mxu0
    %v590 = vpop.f32.mrb[0].mxu0
    %v591 = vadd.f32 %v543, %v590
    %v592 = vpop.f32.mrb[0].mxu0
    %593 = vmatprep.mubr.bf16.mxu0 0
    %594 = vmatmul.mubr.bf16.gmra.mrb[0].mxu0 %v258
    %v595 = vpop.f32.mrb[0].mxu0
    %v596 = vadd.f32 %v543, %v595
    %v597 = vpop.f32.mrb[0].mxu0
    %v598 = vpop.f32.mrb[0].mxu0
    %v599 = vadd.f32 %v543, %v598
    %v600 = vpop.f32.mrb[0].mxu0
    %601 = vmatprep.mubr.bf16.mxu0 0
    %602 = vmatmul.mubr.bf16.gmra.mrb[0].mxu0 %v259
    %v603 = vpop.f32.mrb[0].mxu0
    %v604 = vadd.f32 %v543, %v603
    %v605 = vpop.f32.mrb[0].mxu0
    %v606 = vpop.f32.mrb[0].mxu0
    %v607 = vadd.f32 %v543, %v606
    %v608 = vpop.f32.mrb[0].mxu0
    %609 = vmatprep.mubr.bf16.mxu0 0
    %610 = vmatmul.mubr.bf16.gmra.mrb[0].mxu0 %v260
    %v611 = vpop.f32.mrb[0].mxu0
    %v612 = vadd.f32 %v543, %v611
    %v613 = vpop.f32.mrb[0].mxu0
    %v614 = vpop.f32.mrb[0].mxu0
    %v615 = vadd.f32 %v543, %v614
    %v616 = vpop.f32.mrb[0].mxu0
    %617 = vmatprep.mubr.bf16.mxu0 0
    %618 = vmatmul.mubr.bf16.gmra.mrb[0].mxu0 %v261
    %v619 = vpop.f32.mrb[0].mxu0
    %v620 = vadd.f32 %v543, %v619
    %v621 = vpop.f32.mrb[0].mxu0
    %v622 = vpop.f32.mrb[0].mxu0
    %v623 = vadd.f32 %v543, %v622
    %v624 = vpop.f32.mrb[0].mxu0
    %625 = vmatprep.mubr.bf16.mxu0 0
    %626 = vmatmul.mubr.bf16.gmra.mrb[0].mxu0 %v262
    %v627 = vpop.f32.mrb[0].mxu0
    %v628 = vadd.f32 %v543, %v627
    %v629 = vpop.f32.mrb[0].mxu0
    %v630 = vpop.f32.mrb[0].mxu0
    %v631 = vadd.f32 %v543, %v630
    %v632 = vpop.f32.mrb[0].mxu0
    %633 = vmatprep.mubr.bf16.mxu0 0
    %634 = vmatmul.mubr.bf16.gmra.mrb[0].mxu0 %v263
    %v635 = vpop.f32.mrb[0].mxu0
    %v636 = vadd.f32 %v543, %v635
    %v637 = vpop.f32.mrb[0].mxu0
    %v638 = vpop.f32.mrb[0].mxu0
    %v639 = vadd.f32 %v543, %v638
    %v640 = vpop.f32.mrb[0].mxu0
    %641 = vdwg.mxu0
    %v642 = vmax.f32 %v580, 0.0
    %v643 = vmax.f32 %v583, 0.0
    %v644 = vmax.f32 %v588, 0.0
    %v645 = vmax.f32 %v591, 0.0
    %v646 = vmax.f32 %v596, 0.0
    %v647 = vmax.f32 %v599, 0.0
    %v648 = vmax.f32 %v604, 0.0
    %v649 = vmax.f32 %v607, 0.0
    %v650 = vmax.f32 %v612, 0.0
    %v651 = vmax.f32 %v615, 0.0
    %v652 = vmax.f32 %v620, 0.0
    %v653 = vmax.f32 %v623, 0.0
    %v654 = vmax.f32 %v628, 0.0
    %v655 = vmax.f32 %v631, 0.0
    %v656 = vmax.f32 %v636, 0.0
    %v657 = vmax.f32 %v639, 0.0
    %v658 = vpack.c.bf16 %v643, %v642
    %v659 = vpack.c.bf16 %v645, %v644
    %v660 = vpack.c.bf16 %v647, %v646
    %v661 = vpack.c.bf16 %v649, %v648
    %v662 = vpack.c.bf16 %v651, %v650
    %v663 = vpack.c.bf16 %v653, %v652
    %v664 = vpack.c.bf16 %v655, %v654
    %v665 = vpack.c.bf16 %v657, %v656
    %v666 = vld [vmem:[%s6] sm:$0xf]
    %v667 = vld [vmem:[%s6 + $0x4] sm:$0xf]
    %v668 = vld [vmem:[%s6 + $0x8] sm:$0xf]
    %v669 = vld [vmem:[%s6 + $0xc] sm:$0xf]
    %v674 = vunpack.c.l.b16 %v666
    %v675 = vunpack.c.l.b16 %v667
    %v676 = vunpack.c.l.b16 %v668
    %v677 = vunpack.c.l.b16 %v669
    %v678 = vpack.c.b16 %v675, %v674
    %v679 = vpack.c.b16 %v677, %v676
    %v683 = vsel %vm87, %v658, 0
    %v686 = vsel %vm87, %v659, 0
    %v689 = vsel %vm87, %v660, 0
    %v692 = vsel %vm87, %v661, 0
    %v695 = vsel %vm87, %v662, 0
    %v698 = vsel %vm87, %v663, 0
    %v701 = vsel %vm87, %v664, 0
    %v704 = vsel %vm87, %v665, 0
    %706 = vmatprep.subr.bf16.mxu0 0
    %707 = vmatpush1.bf16.msra.mxu0 %v678
    %708 = vmatprep.subr.bf16.mxu0 0
    %709 = vmatpush1.bf16.msra.mxu0 %v679
    %710 = vmatprep.subr.bf16.mxu0 0
    %711 = vmatpush1.bf16.msra.mxu0 0
    %712 = vmatprep.subr.bf16.mxu0 0
    %713 = vmatpush1.bf16.msra.mxu0 0
    %714 = vmatprep.subr.bf16.mxu0 0
    %715 = vmatpush1.bf16.msra.mxu0 0
    %716 = vmatprep.subr.bf16.mxu0 0
    %717 = vmatpush1.bf16.msra.mxu0 0
    %718 = vmatprep.subr.bf16.mxu0 0
    %719 = vmatpush1.bf16.msra.mxu0 0
    %720 = vmatprep.subr.bf16.mxu0 0
    %721 = vmatpush1.bf16.msra.mxu0 0
    %722 = vmatprep.subr.bf16.mxu0 0
    %723 = vmatpush1.bf16.msra.mxu0 0
    %724 = vmatprep.subr.bf16.mxu0 0
    %725 = vmatpush1.bf16.msra.mxu0 0
    %726 = vmatprep.subr.bf16.mxu0 0
    %727 = vmatpush1.bf16.msra.mxu0 0
    %728 = vmatprep.subr.bf16.mxu0 0
    %729 = vmatpush1.bf16.msra.mxu0 0
    %730 = vmatprep.subr.bf16.mxu0 0
    %731 = vmatpush1.bf16.msra.mxu0 0
    %732 = vmatprep.subr.bf16.mxu0 0
    %733 = vmatpush1.bf16.msra.mxu0 0
    %734 = vmatprep.subr.bf16.mxu0 0
    %735 = vmatpush1.bf16.msra.mxu0 0
    %736 = vmatprep.subr.bf16.mxu0 0
    %737 = vmatpush1.bf16.msra.mxu0 0
    %738 = vmatprep.mubr.bf16.mxu0 0
    %739 = vmatmul.mubr.bf16.gmra.mrb[0].mxu0 %v683
    %v740 = vpop.f32.mrb[0].mxu0
    %v741 = vadd.f32 0.0, %v740
    %v742 = vpop.f32.mrb[0].mxu0
    %v743 = vpop.f32.mrb[0].mxu0
    %v744 = vadd.f32 0.0, %v743
    %v745 = vpop.f32.mrb[0].mxu0
    %746 = vmatprep.mubr.bf16.mxu0 0
    %747 = vmatmul.mubr.bf16.gmra.mrb[0].mxu0 %v686
    %v748 = vpop.f32.mrb[0].mxu0
    %v749 = vadd.f32 0.0, %v748
    %v750 = vpop.f32.mrb[0].mxu0
    %v751 = vpop.f32.mrb[0].mxu0
    %v752 = vadd.f32 0.0, %v751
    %v753 = vpop.f32.mrb[0].mxu0
    %754 = vmatprep.mubr.bf16.mxu0 0
    %755 = vmatmul.mubr.bf16.gmra.mrb[0].mxu0 %v689
    %v756 = vpop.f32.mrb[0].mxu0
    %v757 = vadd.f32 0.0, %v756
    %v758 = vpop.f32.mrb[0].mxu0
    %v759 = vpop.f32.mrb[0].mxu0
    %v760 = vadd.f32 0.0, %v759
    %v761 = vpop.f32.mrb[0].mxu0
    %762 = vmatprep.mubr.bf16.mxu0 0
    %763 = vmatmul.mubr.bf16.gmra.mrb[0].mxu0 %v692
    %v764 = vpop.f32.mrb[0].mxu0
    %v765 = vadd.f32 0.0, %v764
    %v766 = vpop.f32.mrb[0].mxu0
    %v767 = vpop.f32.mrb[0].mxu0
    %v768 = vadd.f32 0.0, %v767
    %v769 = vpop.f32.mrb[0].mxu0
    %770 = vmatprep.mubr.bf16.mxu0 0
    %771 = vmatmul.mubr.bf16.gmra.mrb[0].mxu0 %v695
    %v772 = vpop.f32.mrb[0].mxu0
    %v773 = vadd.f32 0.0, %v772
    %v774 = vpop.f32.mrb[0].mxu0
    %v775 = vpop.f32.mrb[0].mxu0
    %v776 = vadd.f32 0.0, %v775
    %v777 = vpop.f32.mrb[0].mxu0
    %778 = vmatprep.mubr.bf16.mxu0 0
    %779 = vmatmul.mubr.bf16.gmra.mrb[0].mxu0 %v698
    %v780 = vpop.f32.mrb[0].mxu0
    %v781 = vadd.f32 0.0, %v780
    %v782 = vpop.f32.mrb[0].mxu0
    %v783 = vpop.f32.mrb[0].mxu0
    %v784 = vadd.f32 0.0, %v783
    %v785 = vpop.f32.mrb[0].mxu0
    %786 = vmatprep.mubr.bf16.mxu0 0
    %787 = vmatmul.mubr.bf16.gmra.mrb[0].mxu0 %v701
    %v788 = vpop.f32.mrb[0].mxu0
    %v789 = vadd.f32 0.0, %v788
    %v790 = vpop.f32.mrb[0].mxu0
    %v791 = vpop.f32.mrb[0].mxu0
    %v792 = vadd.f32 0.0, %v791
    %v793 = vpop.f32.mrb[0].mxu0
    %794 = vmatprep.mubr.bf16.mxu0 0
    %795 = vmatmul.mubr.bf16.gmra.mrb[0].mxu0 %v704
    %v796 = vpop.f32.mrb[0].mxu0
    %v797 = vadd.f32 0.0, %v796
    %v798 = vpop.f32.mrb[0].mxu0
    %v799 = vpop.f32.mrb[0].mxu0
    %v800 = vadd.f32 0.0, %v799
    %v801 = vpop.f32.mrb[0].mxu0
    %802 = vdwg.mxu0
    %v803 = vpack.c.bf16 %v744, %v741
    %v804 = vpack.c.bf16 %v752, %v749
    %v805 = vpack.c.bf16 %v760, %v757
    %v806 = vpack.c.bf16 %v768, %v765
    %v807 = vpack.c.bf16 %v776, %v773
    %v808 = vpack.c.bf16 %v784, %v781
    %v809 = vpack.c.bf16 %v792, %v789
    %v810 = vpack.c.bf16 %v800, %v797
    %v811 = vld [vmem:[%s7] sm:$0x1]
    %v813 = vlaneseq
    %v814 = vshrl.u32 %v813, 7
    %v815 = vsub.s32 0, %v814
    %v816 = vrot.slane %v811, %v815
    %818 = vmatprep.subr.bf16.mxu0 0
    %819 = vmatpush1.bf16.msra.mxu0 %v803
    %820 = vmatprep.subr.bf16.mxu0 0
    %821 = vmatpush1.bf16.msra.mxu0 %v804
    %822 = vmatprep.subr.bf16.mxu0 0
    %823 = vmatpush1.bf16.msra.mxu0 %v805
    %824 = vmatprep.subr.bf16.mxu0 0
    %825 = vmatpush1.bf16.msra.mxu0 %v806
    %826 = vmatprep.subr.bf16.mxu0 0
    %827 = vmatpush1.bf16.msra.mxu0 %v807
    %828 = vmatprep.subr.bf16.mxu0 0
    %829 = vmatpush1.bf16.msra.mxu0 %v808
    %830 = vmatprep.subr.bf16.mxu0 0
    %831 = vmatpush1.bf16.msra.mxu0 %v809
    %832 = vmatprep.subr.bf16.mxu0 0
    %833 = vmatpush1.bf16.msra.mxu0 %v810
    %834 = vmatprep.subr.bf16.mxu0 0
    %835 = vmatpush1.bf16.msra.mxu0 0
    %836 = vmatprep.subr.bf16.mxu0 0
    %837 = vmatpush1.bf16.msra.mxu0 0
    %838 = vmatprep.subr.bf16.mxu0 0
    %839 = vmatpush1.bf16.msra.mxu0 0
    %840 = vmatprep.subr.bf16.mxu0 0
    %841 = vmatpush1.bf16.msra.mxu0 0
    %842 = vmatprep.subr.bf16.mxu0 0
    %843 = vmatpush1.bf16.msra.mxu0 0
    %844 = vmatprep.subr.bf16.mxu0 0
    %845 = vmatpush1.bf16.msra.mxu0 0
    %846 = vmatprep.subr.bf16.mxu0 0
    %847 = vmatpush1.bf16.msra.mxu0 0
    %848 = vmatprep.subr.bf16.mxu0 0
    %849 = vmatpush1.bf16.msra.mxu0 0
    %850 = vmatprep.mubr.bf16.mxu0 0
    %851 = vmatmul.mubr.bf16.gmra.mrb[0].mxu0 %v256
    %v852 = vpop.f32.mrb[0].mxu0
    %v853 = vadd.f32 %v816, %v852
    %v854 = vpop.f32.mrb[0].mxu0
    %v855 = vpop.f32.mrb[0].mxu0
    %v856 = vadd.f32 %v816, %v855
    %v857 = vpop.f32.mrb[0].mxu0
    %858 = vmatprep.mubr.bf16.mxu0 0
    %859 = vmatmul.mubr.bf16.gmra.mrb[0].mxu0 %v257
    %v860 = vpop.f32.mrb[0].mxu0
    %v861 = vadd.f32 %v816, %v860
    %v862 = vpop.f32.mrb[0].mxu0
    %v863 = vpop.f32.mrb[0].mxu0
    %v864 = vadd.f32 %v816, %v863
    %v865 = vpop.f32.mrb[0].mxu0
    %866 = vmatprep.mubr.bf16.mxu0 0
    %867 = vmatmul.mubr.bf16.gmra.mrb[0].mxu0 %v258
    %v868 = vpop.f32.mrb[0].mxu0
    %v869 = vadd.f32 %v816, %v868
    %v870 = vpop.f32.mrb[0].mxu0
    %v871 = vpop.f32.mrb[0].mxu0
    %v872 = vadd.f32 %v816, %v871
    %v873 = vpop.f32.mrb[0].mxu0
    %874 = vmatprep.mubr.bf16.mxu0 0
    %875 = vmatmul.mubr.bf16.gmra.mrb[0].mxu0 %v259
    %v876 = vpop.f32.mrb[0].mxu0
    %v877 = vadd.f32 %v816, %v876
    %v878 = vpop.f32.mrb[0].mxu0
    %v879 = vpop.f32.mrb[0].mxu0
    %v880 = vadd.f32 %v816, %v879
    %v881 = vpop.f32.mrb[0].mxu0
    %882 = vmatprep.mubr.bf16.mxu0 0
    %883 = vmatmul.mubr.bf16.gmra.mrb[0].mxu0 %v260
    %v884 = vpop.f32.mrb[0].mxu0
    %v885 = vadd.f32 %v816, %v884
    %v886 = vpop.f32.mrb[0].mxu0
    %v887 = vpop.f32.mrb[0].mxu0
    %v888 = vadd.f32 %v816, %v887
    %v889 = vpop.f32.mrb[0].mxu0
    %890 = vmatprep.mubr.bf16.mxu0 0
    %891 = vmatmul.mubr.bf16.gmra.mrb[0].mxu0 %v261
    %v892 = vpop.f32.mrb[0].mxu0
    %v893 = vadd.f32 %v816, %v892
    %v894 = vpop.f32.mrb[0].mxu0
    %v895 = vpop.f32.mrb[0].mxu0
    %v896 = vadd.f32 %v816, %v895
    %v897 = vpop.f32.mrb[0].mxu0
    %898 = vmatprep.mubr.bf16.mxu0 0
    %899 = vmatmul.mubr.bf16.gmra.mrb[0].mxu0 %v262
    %v900 = vpop.f32.mrb[0].mxu0
    %v901 = vadd.f32 %v816, %v900
    %v902 = vpop.f32.mrb[0].mxu0
    %v903 = vpop.f32.mrb[0].mxu0
    %v904 = vadd.f32 %v816, %v903
    %v905 = vpop.f32.mrb[0].mxu0
    %906 = vmatprep.mubr.bf16.mxu0 0
    %907 = vmatmul.mubr.bf16.gmra.mrb[0].mxu0 %v263
    %v908 = vpop.f32.mrb[0].mxu0
    %v909 = vadd.f32 %v816, %v908
    %v910 = vpop.f32.mrb[0].mxu0
    %v911 = vpop.f32.mrb[0].mxu0
    %v912 = vadd.f32 %v816, %v911
    %v913 = vpop.f32.mrb[0].mxu0
    %914 = vdwg.mxu0
    %v915 = vmax.f32 %v853, 0.0
    %v916 = vmax.f32 %v856, 0.0
    %v917 = vmax.f32 %v861, 0.0
    %v918 = vmax.f32 %v864, 0.0
    %v919 = vmax.f32 %v869, 0.0
    %v920 = vmax.f32 %v872, 0.0
    %v921 = vmax.f32 %v877, 0.0
    %v922 = vmax.f32 %v880, 0.0
    %v923 = vmax.f32 %v885, 0.0
    %v924 = vmax.f32 %v888, 0.0
    %v925 = vmax.f32 %v893, 0.0
    %v926 = vmax.f32 %v896, 0.0
    %v927 = vmax.f32 %v901, 0.0
    %v928 = vmax.f32 %v904, 0.0
    %v929 = vmax.f32 %v909, 0.0
    %v930 = vmax.f32 %v912, 0.0
    %931 = vst [vmem:[#allocation2] sm:$0xff] %v915
    %932 = vst [vmem:[#allocation2 + $0x8] sm:$0xff] %v916
    %933 = vst [vmem:[#allocation2 + $0x10] sm:$0xff] %v917
    %934 = vst [vmem:[#allocation2 + $0x18] sm:$0xff] %v918
    %935 = vst [vmem:[#allocation2 + $0x20] sm:$0xff] %v919
    %936 = vst [vmem:[#allocation2 + $0x28] sm:$0xff] %v920
    %937 = vst [vmem:[#allocation2 + $0x30] sm:$0xff] %v921
    %938 = vst [vmem:[#allocation2 + $0x38] sm:$0xff] %v922
    %939 = vst [vmem:[#allocation2 + $0x40] sm:$0xff] %v923
    %940 = vst [vmem:[#allocation2 + $0x48] sm:$0xff] %v924
    %941 = vst [vmem:[#allocation2 + $0x50] sm:$0xff] %v925
    %942 = vst [vmem:[#allocation2 + $0x58] sm:$0xff] %v926
    %943 = vst [vmem:[#allocation2 + $0x60] sm:$0xff] %v927
    %944 = vst [vmem:[#allocation2 + $0x68] sm:$0xff] %v928
    %945 = vst [vmem:[#allocation2 + $0x70] sm:$0xff] %v929
    %946 = vst [vmem:[#allocation2 + $0x78] sm:$0xff] %v930
    // Predicated region
    $region34: #{tpu_custom_call.1} parent=1 // pred_check
      _
    $region35: #{tpu_custom_call.1} parent=1 // pred_check_branch
      %948 = sbr.rel (0) target = $region37
    $region36: #{tpu_custom_call.1} parent=1 // pred_region
      %s950 = ssub.s32 2048, 2048
      %951 = vsyncadd [#allocation3], %s950
      %s952 = sshll.u32 [#allocation2], 4
      %s953 = int_to_ptr.vmem [resolvable:$true] %s952
      %958 = dma.vmem_to_hbm [thread:$0]  %s953, 2048, %s8, [#allocation3], 128, 128, 8
    $region37: #{tpu_custom_call.1} parent=1 // pred_fallthru
      _
    // Predicated region
    $region38: #{tpu_custom_call.1} parent=1 // pred_check
      _
    $region39: #{tpu_custom_call.1} parent=1 // pred_check_branch
      %960 = sbr.rel (0) target = $region41
    $region40: #{tpu_custom_call.1} parent=1 // pred_region
      %961 = dma.done [#allocation3], 2048
    $region41: #{tpu_custom_call.1} parent=1 // pred_fallthru
      _
    %962 = vsyncpa [#allocation3], 1

</llo_original>
